<compile_context>
chip_gen: v6e
topology: v6e:2x2x1
jax: 0.10.0
libtpu: 0.0.40
codegen_flags: <defaults>
</compile_context>

<pallas_src>
import math

import jax
import jax.numpy as jnp
from jax.experimental import pallas as pl
from jax.experimental.pallas import tpu as pltpu


_TARGET_BLOCK_BYTES = 2 * 1024 * 1024   # per x / out block (Pallas double-buffers these)
_VMEM_LIMIT_BYTES = 32 * 1024 * 1024    # explicit scoped-VMEM budget: safe on v5e/v6e/v7x


def precompute_rope_tables(dim: int, end: int, theta: float = 10000.0):
    """Interleaved, parity pre-masked RoPE tables, each (end, dim) float32.

    rope(x)[..., j] = x[..., j] * cs[j]
                      + x[..., j+1] * sn_even[j]      (only nonzero at even j)
                      + x[..., j-1] * sn_odd[j]       (only nonzero at odd  j)
    """
    inv = 1.0 / theta ** (jnp.arange(0, dim, 2)[: dim // 2].astype(jnp.float32) / dim)
    t = jnp.arange(end, dtype=jnp.float32)
    freqs = jnp.outer(t, inv)                                   # (end, dim//2)
    cos, sin = jnp.cos(freqs), jnp.sin(freqs)
    zero = jnp.zeros_like(sin)
    cs = jnp.stack([cos, cos], axis=-1).reshape(end, dim)       # cos duplicated per pair
    sn_even = jnp.stack([-sin, zero], axis=-1).reshape(end, dim)  # -sin on even lanes, 0 on odd
    sn_odd = jnp.stack([zero, sin], axis=-1).reshape(end, dim)    # 0 on even lanes, +sin on odd
    return cs, sn_even, sn_odd


def _rope_kernel(x_ref, cs_ref, sne_ref, sno_ref, o_ref):
    # x block: (TN, TL) or (TN, TC, 128); table blocks have a leading 1 and broadcast.
    x = x_ref[...]                              # roll the native-dtype tile, upcast after
    axis = x.ndim - 1
    lanes = x.shape[-1]
    nxt = pltpu.roll(x, shift=lanes - 1, axis=axis)   # nxt[..., j] = x[..., (j+1) % lanes]
    prv = pltpu.roll(x, shift=1, axis=axis)           # prv[..., j] = x[..., (j-1) % lanes]
    out = (x.astype(jnp.float32) * cs_ref[...]
           + nxt.astype(jnp.float32) * sne_ref[...]
           + prv.astype(jnp.float32) * sno_ref[...])
    o_ref[...] = out.astype(o_ref.dtype)


def _round_down(x: int, m: int) -> int:
    return (x // m) * m


def _round_up(x: int, m: int) -> int:
    return ((x + m - 1) // m) * m


def _pick_row_tile(n_rows: int, row_bytes: int) -> int:
    """Rows per block: a multiple of 8 (or all rows if n_rows < 8), ~2 MiB per block."""
    if n_rows < 8:
        return n_rows
    target = max(8, _round_down(_TARGET_BLOCK_BYTES // max(int(row_bytes), 1), 8))
    return min(target, _round_up(n_rows, 8))


def rope_pallas(x: jax.Array, cs_table: jax.Array,
                sne_table: jax.Array, sno_table: jax.Array) -> jax.Array:
    """Applies rotary positional encoding to x of shape (..., S, D), D even."""
    orig_shape = x.shape
    S, D = x.shape[-2], x.shape[-1]
    assert D % 2 == 0, "d_model must be even"
    assert D == cs_table.shape[1], "table width must match d_model"
    assert S <= cs_table.shape[0], "sequence length exceeds max_len"

    N = int(math.prod(x.shape[:-2]))            # collapsed leading dims (>= 1)
    L = S * D
    itemsize = x.dtype.itemsize

    cs, sne, sno = cs_table[:S], sne_table[:S], sno_table[:S]

    compiler_params = pltpu.CompilerParams(
        dimension_semantics=("parallel", "parallel"),
        vmem_limit_bytes=_VMEM_LIMIT_BYTES,
    )

    if L % 128 == 0 and L // 128 >= 8:
        # 3-D layout (N, C, 128): pair swap = within-vreg 128-lane rotations.
        C = L // 128
        row_bytes = C * 128 * itemsize
        if row_bytes <= _TARGET_BLOCK_BYTES:
            TC = C                                       # full, contiguous rows per block
            TN = _pick_row_tile(N, row_bytes)
        else:
            TN = min(N, 8)
            tc = _TARGET_BLOCK_BYTES // max(TN * 128 * itemsize, 1)
            TC = C if tc >= C else max(8, _round_down(tc, 8))
        grid = (pl.cdiv(C, TC), pl.cdiv(N, TN))          # chunk axis outer: cs/sn stay resident
        x_spec = pl.BlockSpec((TN, TC, 128), lambda c, r: (r, c, 0))
        tbl_spec = pl.BlockSpec((1, TC, 128), lambda c, r: (0, c, 0))
        out_shape = jax.ShapeDtypeStruct((N, C, 128), x.dtype)
        args = (x.reshape(N, C, 128), cs.reshape(1, C, 128),
                sne.reshape(1, C, 128), sno.reshape(1, C, 128))
    else:
        # 2-D layout (N, L): full-row blocks when they fit, else even 128-multiple lane tiles.
        if L * itemsize <= _TARGET_BLOCK_BYTES or L < 256:
            TL = L
        else:
            TL = _round_down(_TARGET_BLOCK_BYTES // (8 * itemsize), 128)
            TL = max(128, min(TL, _round_down(L, 128)))
        TN = _pick_row_tile(N, TL * itemsize)
        grid = (pl.cdiv(L, TL), pl.cdiv(N, TN))          # lane axis outer: cs/sn stay resident
        x_spec = pl.BlockSpec((TN, TL), lambda l, r: (r, l))
        tbl_spec = pl.BlockSpec((1, TL), lambda l, r: (0, l))
        out_shape = jax.ShapeDtypeStruct((N, L), x.dtype)
        args = (x.reshape(N, L), cs.reshape(1, L),
                sne.reshape(1, L), sno.reshape(1, L))

    out = pl.pallas_call(
        _rope_kernel,
        out_shape=out_shape,
        grid_spec=pltpu.PrefetchScalarGridSpec(
            num_scalar_prefetch=0,
            grid=grid,
            in_specs=[x_spec, tbl_spec, tbl_spec, tbl_spec],
            out_specs=x_spec,
        ),
        compiler_params=compiler_params,
    )(*args)

    return out.reshape(orig_shape)


class RotaryPositionalEncoding:
    """Deterministic JAX/Pallas port of the PyTorch module."""

    def __init__(self, d_model: int, max_len: int, theta: float = 10000.0):
        assert d_model % 2 == 0, "d_model should be even"
        self.d_model = d_model
        self.max_len = max_len
        self.cs, self.sn_even, self.sn_odd = precompute_rope_tables(d_model, max_len, theta)

    def __call__(self, x: jax.Array) -> jax.Array:
        return rope_pallas(x, self.cs, self.sn_even, self.sn_odd)


def _rope_reference(x, d_model, max_len, theta=10000.0):
    """Pure-JAX reference mirroring the PyTorch forward exactly."""
    inv = 1.0 / theta ** (jnp.arange(0, d_model, 2)[: d_model // 2].astype(jnp.float32) / d_model)
    t = jnp.arange(max_len, dtype=jnp.float32)
    freqs = jnp.outer(t, inv)
    fc = jnp.stack([jnp.cos(freqs), jnp.sin(freqs)], axis=-1)   # (max_len, D/2, 2)
    S, D = x.shape[-2], x.shape[-1]
    xs = x.reshape(*x.shape[:-1], D // 2, 2)
    fcs = fc[:S]
    out = jnp.stack(
        [
            xs[..., 0] * fcs[..., 0] - xs[..., 1] * fcs[..., 1],
            xs[..., 0] * fcs[..., 1] + xs[..., 1] * fcs[..., 0],
        ],
        axis=-1,
    )
    return out.reshape(x.shape).astype(x.dtype)


if __name__ == "__main__":
    key = jax.random.PRNGKey(0)
    k1, k2 = jax.random.split(key)

    # Config 1: small head_dim -> 2-D full-row path.  batch=2, heads=4, seq=8, d_model=32.
    d_model, max_len = 32, 16
    B, H, S = 2, 4, 8
    x1 = jax.random.normal(k1, (B, H, S, d_model), dtype=jnp.float32)
    rope1 = RotaryPositionalEncoding(d_model, max_len)
    out1 = jax.block_until_ready(rope1(x1))
    ref1 = _rope_reference(x1, d_model, max_len)
    assert out1.shape == x1.shape and out1.dtype == x1.dtype
    assert jnp.allclose(out1, ref1, atol=1e-5, rtol=1e-5), "mismatch vs reference (2-D path)"

    # Config 2: head_dim 128 -> 3-D within-vreg-roll path.  batch=2, heads=2, seq=8, d_model=128.
    d_model2, max_len2 = 128, 16
    B2, H2, S2 = 2, 2, 8
    x2 = jax.random.normal(k2, (B2, H2, S2, d_model2), dtype=jnp.float32)
    rope2 = RotaryPositionalEncoding(d_model2, max_len2)
    out2 = jax.block_until_ready(rope2(x2))
    ref2 = _rope_reference(x2, d_model2, max_len2)
    assert out2.shape == x2.shape and out2.dtype == x2.dtype
    assert jnp.allclose(out2, ref2, atol=1e-5, rtol=1e-5), "mismatch vs reference (3-D path)"

    print("KERNEL_OK")
</pallas_src>

<mosaic_0001>
module attributes {stable_mosaic.version = 11 : i64} {
  func.func @_rope_kernel(%arg0: i32, %arg1: i32, %arg2: memref<8x256xf32, #tpu.memory_space<vmem>>, %arg3: memref<1x256xf32, #tpu.memory_space<vmem>>, %arg4: memref<1x256xf32, #tpu.memory_space<vmem>>, %arg5: memref<1x256xf32, #tpu.memory_space<vmem>>, %arg6: memref<8x256xf32, #tpu.memory_space<vmem>>) attributes {dimension_semantics = [#tpu.dimension_semantics<parallel>, #tpu.dimension_semantics<parallel>], iteration_bounds = array<i64: 1, 1>, scalar_prefetch = 0 : i64, scratch_operands = 0 : i64, tpu.core_type = #tpu.core_type<tc>, window_params = [{transform_indices = @transform_0, window_bounds = array<i64: 8, 256>}, {transform_indices = @transform_1, window_bounds = array<i64: 1, 256>}, {transform_indices = @transform_2, window_bounds = array<i64: 1, 256>}, {transform_indices = @transform_3, window_bounds = array<i64: 1, 256>}, {transform_indices = @transform_4, window_bounds = array<i64: 8, 256>}]} {
    %c0 = arith.constant 0 : index
    %c0_0 = arith.constant 0 : index
    %0 = vector.load %arg2[%c0, %c0_0] : memref<8x256xf32, #tpu.memory_space<vmem>>, vector<8x256xf32>
    %c255_i32 = arith.constant 255 : i32
    %1 = tpu.dynamic_rotate %0 by %c255_i32 dim 1 : vector<8x256xf32>, i32 -> vector<8x256xf32>
    %c1_i32 = arith.constant 1 : i32
    %2 = tpu.dynamic_rotate %0 by %c1_i32 dim 1 : vector<8x256xf32>, i32 -> vector<8x256xf32>
    %c0_1 = arith.constant 0 : index
    %c0_2 = arith.constant 0 : index
    %3 = vector.load %arg3[%c0_1, %c0_2] : memref<1x256xf32, #tpu.memory_space<vmem>>, vector<1x256xf32>
    %4 = vector.broadcast %3 : vector<1x256xf32> to vector<8x256xf32>
    %5 = arith.mulf %0, %4 : vector<8x256xf32>
    %c0_3 = arith.constant 0 : index
    %c0_4 = arith.constant 0 : index
    %6 = vector.load %arg4[%c0_3, %c0_4] : memref<1x256xf32, #tpu.memory_space<vmem>>, vector<1x256xf32>
    %7 = vector.broadcast %6 : vector<1x256xf32> to vector<8x256xf32>
    %8 = arith.mulf %1, %7 : vector<8x256xf32>
    %9 = arith.addf %5, %8 : vector<8x256xf32>
    %c0_5 = arith.constant 0 : index
    %c0_6 = arith.constant 0 : index
    %10 = vector.load %arg5[%c0_5, %c0_6] : memref<1x256xf32, #tpu.memory_space<vmem>>, vector<1x256xf32>
    %11 = vector.broadcast %10 : vector<1x256xf32> to vector<8x256xf32>
    %12 = arith.mulf %2, %11 : vector<8x256xf32>
    %13 = arith.addf %9, %12 : vector<8x256xf32>
    %c0_7 = arith.constant 0 : index
    %c0_8 = arith.constant 0 : index
    %14 = vector.load %arg6[%c0_7, %c0_8] : memref<8x256xf32, #tpu.memory_space<vmem>>, vector<8x256xf32>
    tpu.vector_store %arg6[%c0_7, %c0_8], %13 {strides = array<i32>} : memref<8x256xf32, #tpu.memory_space<vmem>>, vector<8x256xf32>,
    return
  }
  func.func @transform_0(%arg0: i32, %arg1: i32) -> (i32, i32) {
    %c0_i32 = arith.constant 0 : i32
    return %arg1, %arg0 : i32, i32
  }
  func.func @transform_1(%arg0: i32, %arg1: i32) -> (i32, i32) {
    %c0_i32 = arith.constant 0 : i32
    %c0_i32_0 = arith.constant 0 : i32
    return %c0_i32, %arg0 : i32, i32
  }
  func.func @transform_2(%arg0: i32, %arg1: i32) -> (i32, i32) {
    %c0_i32 = arith.constant 0 : i32
    %c0_i32_0 = arith.constant 0 : i32
    return %c0_i32, %arg0 : i32, i32
  }
  func.func @transform_3(%arg0: i32, %arg1: i32) -> (i32, i32) {
    %c0_i32 = arith.constant 0 : i32
    %c0_i32_0 = arith.constant 0 : i32
    return %c0_i32, %arg0 : i32, i32
  }
  func.func @transform_4(%arg0: i32, %arg1: i32) -> (i32, i32) {
    %c0_i32 = arith.constant 0 : i32
    return %arg1, %arg0 : i32, i32
  }
}

</mosaic_0001>

<llo_original>
// kernel: tpu_custom_call.1
$region0: #{tpu_custom_call.1}
  #allocation0 [shape = 'u32[]', space=smem, size = 0x4, offset = 0x4, fixed_abs, tag = 'smem constant byte address 0x4 - core index']
  #allocation1 [shape = 'u32[144,128]{1,0:T(1,128)}', space=vmem, size = 0x12000, scoped, tag = 'internal scratch']
  %s0 = inlined_call_operand.hbm [shape: f32[8,256], index: 0, kind: input, shape index: {}]
  %s1 = inlined_call_operand.hbm [shape: f32[1,256], index: 1, kind: input, shape index: {}]
  %s2 = inlined_call_operand.vmem [shape: f32[1,256], index: 2, kind: input, shape index: {}]
  %s3 = inlined_call_operand.vmem [shape: f32[1,256], index: 3, kind: input, shape index: {}]
  %s4 = inlined_call_operand.hbm [shape: f32[8,256], index: 4, kind: output, shape index: {}]
  %s5 = sld [smem:[#allocation0]]
  $region34: #{tpu_custom_call.1} parent=0
    _
  %s7 = ssub.s32 1, %s5
  %s8 = scalar_select 0, %s7, %s5
  $region1: #{tpu_custom_call.1} parent=0
    #allocation2 [shape = 'u8[8192]{0}', space=vmem, size = 0x2000, scoped, tag = 'input window, operand 0, single buffered']
    #allocation3 [shape = 's32[1]{0}', space=sflag, size = 0x4, scoped, tag = 'scoped memory for tpu_custom_call.1']
    #allocation4 [shape = 's32[1]{0}', space=sflag, size = 0x4, scoped, tag = 'scoped memory for tpu_custom_call.1']
    #allocation5 [shape = 'u8[1024]{0}', space=vmem, size = 0x400, scoped, tag = 'input window, operand 1, single buffered']
    #allocation6 [shape = 's32[1]{0}', space=sflag, size = 0x4, scoped, tag = 'scoped memory for tpu_custom_call.1']
    #allocation7 [shape = 'u8[8192]{0}', space=vmem, size = 0x2000, scoped, tag = 'output window, operand 0, single buffered']
    %9 = vsyncpa [#allocation3], 0
    %10 = vsyncpa [#allocation6], 0
    %11 = vsyncpa [#allocation4], 0
    // Predicated region
    $region2: #{tpu_custom_call.1} parent=1 // pred_check
      _
    $region3: #{tpu_custom_call.1} parent=1 // pred_check_branch
      %13 = sbr.rel (0) target = $region5
    $region4: #{tpu_custom_call.1} parent=1 // pred_region
      %s15 = ssub.s32 256, 256
      %16 = vsyncadd [#allocation3], %s15
      %s18 = sshll.u32 [#allocation2], 4
      %s19 = int_to_ptr.vmem [resolvable:$true] %s18
      %21 = dma.hbm_to_vmem [thread:$0]  %s0, 256, %s19, [#allocation3]
    $region5: #{tpu_custom_call.1} parent=1 // pred_fallthru
      _
    // Predicated region
    $region6: #{tpu_custom_call.1} parent=1 // pred_check
      _
    $region7: #{tpu_custom_call.1} parent=1 // pred_check_branch
      %23 = sbr.rel (0) target = $region9
    $region8: #{tpu_custom_call.1} parent=1 // pred_region
      %s25 = ssub.s32 32, 32
      %26 = vsyncadd [#allocation6], %s25
      %s28 = sshll.u32 [#allocation5], 4
      %s29 = int_to_ptr.vmem [resolvable:$true] %s28
      %31 = dma.hbm_to_vmem [thread:$0]  %s1, 32, %s29, [#allocation6]
    $region9: #{tpu_custom_call.1} parent=1 // pred_fallthru
      _
    // Predicated region
    $region10: #{tpu_custom_call.1} parent=1 // pred_check
      _
    $region11: #{tpu_custom_call.1} parent=1 // pred_check_branch
      %33 = sbr.rel (0) target = $region13
    $region12: #{tpu_custom_call.1} parent=1 // pred_region
      _
    $region13: #{tpu_custom_call.1} parent=1 // pred_fallthru
      _
    // Predicated region
    $region14: #{tpu_custom_call.1} parent=1 // pred_check
      _
    $region15: #{tpu_custom_call.1} parent=1 // pred_check_branch
      %35 = sbr.rel (0) target = $region17
    $region16: #{tpu_custom_call.1} parent=1 // pred_region
      _
    $region17: #{tpu_custom_call.1} parent=1 // pred_fallthru
      _
    // Predicated region
    $region18: #{tpu_custom_call.1} parent=1 // pred_check
      _
    $region19: #{tpu_custom_call.1} parent=1 // pred_check_branch
      %37 = sbr.rel (0) target = $region21
    $region20: #{tpu_custom_call.1} parent=1 // pred_region
      %38 = dma.done [#allocation3], 256
    $region21: #{tpu_custom_call.1} parent=1 // pred_fallthru
      _
    // Predicated region
    $region22: #{tpu_custom_call.1} parent=1 // pred_check
      _
    $region23: #{tpu_custom_call.1} parent=1 // pred_check_branch
      %40 = sbr.rel (0) target = $region25
    $region24: #{tpu_custom_call.1} parent=1 // pred_region
      %41 = dma.done [#allocation6], 32
    $region25: #{tpu_custom_call.1} parent=1 // pred_fallthru
      _
    %v42 = vld [vmem:[#allocation2] sm:$0xff]
    %v43 = vld [vmem:[#allocation2 + $0x8] sm:$0xff]
    %44 = vrot.lane.b32.xlu0 %v42, 127
    %v45 = vpop.permute.xlu0 %44
    %46 = vrot.lane.b32.xlu0 %v43, 127
    %v47 = vpop.permute.xlu0 %46
    %v48 = vlaneseq
    %v49 = vand.u32 %v48, 127
    %vm50 = vcmp.lt.s32.totalorder %v49, 127
    %v51 = vsel %vm50, %v45, %v47
    %v52 = vsel %vm50, %v47, %v45
    %53 = vrot.lane.b32.xlu0 %v42, 1
    %v54 = vpop.permute.xlu0 %53
    %55 = vrot.lane.b32.xlu0 %v43, 1
    %v56 = vpop.permute.xlu0 %55
    %vm57 = vcmp.lt.s32.totalorder %v49, 1
    %v58 = vsel %vm57, %v54, %v56
    %v59 = vsel %vm57, %v56, %v54
    %v60 = vld [vmem:[#allocation5] sm:$0x3]
    %v62 = vlaneseq
    %v63 = vshrl.u32 %v62, 7
    %v64 = vsub.s32 0, %v63
    %v65 = vrot.slane %v60, %v64
    %v66 = vlaneseq
    %v67 = vshrl.u32 %v66, 7
    %v68 = vsub.s32 1, %v67
    %v69 = vrot.slane %v60, %v68
    %v72 = vmul.f32 %v42, %v65
    %v73 = vmul.f32 %v43, %v69
    %v74 = vld [vmem:[%s2] sm:$0x3]
    %v76 = vlaneseq
    %v77 = vshrl.u32 %v76, 7
    %v78 = vsub.s32 0, %v77
    %v79 = vrot.slane %v74, %v78
    %v80 = vlaneseq
    %v81 = vshrl.u32 %v80, 7
    %v82 = vsub.s32 1, %v81
    %v83 = vrot.slane %v74, %v82
    %v86 = vmul.f32 %v51, %v79
    %v87 = vmul.f32 %v52, %v83
    %v88 = vadd.f32 %v72, %v86
    %v89 = vadd.f32 %v73, %v87
    %v90 = vld [vmem:[%s3] sm:$0x3]
    %v92 = vlaneseq
    %v93 = vshrl.u32 %v92, 7
    %v94 = vsub.s32 0, %v93
    %v95 = vrot.slane %v90, %v94
    %v96 = vlaneseq
    %v97 = vshrl.u32 %v96, 7
    %v98 = vsub.s32 1, %v97
    %v99 = vrot.slane %v90, %v98
    %v102 = vmul.f32 %v59, %v95
    %v103 = vmul.f32 %v58, %v99
    %v104 = vadd.f32 %v88, %v102
    %v105 = vadd.f32 %v89, %v103
    %106 = vst [vmem:[#allocation7] sm:$0xff] %v104
    %107 = vst [vmem:[#allocation7 + $0x8] sm:$0xff] %v105
    // Predicated region
    $region26: #{tpu_custom_call.1} parent=1 // pred_check
      _
    $region27: #{tpu_custom_call.1} parent=1 // pred_check_branch
      %109 = sbr.rel (0) target = $region29
    $region28: #{tpu_custom_call.1} parent=1 // pred_region
      %s111 = ssub.s32 256, 256
      %112 = vsyncadd [#allocation4], %s111
      %s114 = sshll.u32 [#allocation7], 4
      %s115 = int_to_ptr.vmem [resolvable:$true] %s114
      %117 = dma.vmem_to_hbm [thread:$0]  %s115, 256, %s4, [#allocation4]
    $region29: #{tpu_custom_call.1} parent=1 // pred_fallthru
      _
    // Predicated region
    $region30: #{tpu_custom_call.1} parent=1 // pred_check
      _
    $region31: #{tpu_custom_call.1} parent=1 // pred_check_branch
      %119 = sbr.rel (0) target = $region33
    $region32: #{tpu_custom_call.1} parent=1 // pred_region
      %120 = dma.done [#allocation4], 256
    $region33: #{tpu_custom_call.1} parent=1 // pred_fallthru
      _
    %121 = vsyncpa [#allocation3], 1
    %122 = vsyncpa [#allocation6], 1
    %123 = vsyncpa [#allocation4], 1

</llo_original>
